<compile_context>
chip_gen: v6e
topology: v6e:2x2x1
jax: 0.10.0
libtpu: 0.0.40
codegen_flags: <defaults>
</compile_context>

<pallas_src>
import jax
import jax.numpy as jnp
from jax.experimental import pallas as pl
from jax.experimental.pallas import tpu as pltpu

_LANE = 128
_SUBLANE = 8


def _sigmoid_kernel(x_ref, o_ref):
    # Elementwise sigmoid on the current VMEM tile.  Computed in the input
    # dtype (no forced f32 upcast -> bf16 inputs stay bf16 on v6e/v7x; Mosaic
    # inserts the needed casts on v5e).  exp() runs on the EUP slot; the exact
    # divide is kept (the kernel is HBM-bound, the divide never binds a VLIW
    # slot) so numerics match PyTorch nn.Sigmoid.  pl.reciprocal(d, approx=True)
    # would also move the divide to the EUP at a small accuracy cost.
    x = x_ref[...]
    o_ref[...] = (1.0 / (1.0 + jnp.exp(-x))).astype(o_ref.dtype)


def sigmoid_pallas(x: jax.Array) -> jax.Array:
    """Elementwise sigmoid via a Pallas TPU kernel. Preserves shape and dtype."""
    orig_shape = x.shape
    dtype = x.dtype
    n = x.size

    # Degenerate / empty input: nothing to do.
    if n == 0:
        return x

    flat = x.reshape(-1)  # row-major flatten: free (bitcast) reshape in XLA

    # ---- pick slab width W (multiple of 128, as wide as possible) ----------
    # Prefer the widest W that divides n exactly AND gives >= 8 rows (full
    # sublane tiles, unmasked vst); otherwise the widest exact divisor; only
    # pad in the truly ragged case (costs one extra HBM pass).
    W = None
    for cand in (2048, 1024, 512, 256, 128):
        if n % cand == 0 and (n // cand) >= _SUBLANE:
            W = cand
            break
    if W is None:
        for cand in (2048, 1024, 512, 256, 128):
            if n % cand == 0:
                W = cand
                break
    padded_n = n
    if W is None:
        W = _LANE
        padded_n = pl.cdiv(n, W) * W
        flat = jnp.pad(flat, (0, padded_n - n))

    rows = padded_n // W
    x2d = flat.reshape(rows, W)

    # ---- pick tile_rows so one tile is ~2 MiB -------------------------------
    itemsize = jnp.dtype(dtype).itemsize
    target_tile_bytes = 2 * 1024 * 1024
    target_rows = max(1, target_tile_bytes // (W * itemsize))

    if rows < _SUBLANE:
        # Tiny input: a single block covering the whole array (block shape ==
        # array shape is always a legal TPU layout).
        tile_rows = rows
    else:
        tile_rows = min(target_rows, rows)
        # Multiple of 8 sublanes; ragged last block handled by the cdiv grid.
        tile_rows = max(_SUBLANE, (tile_rows // _SUBLANE) * _SUBLANE)
        # v7x has 2 TensorCores: make sure the parallel grid axis has >= 2
        # steps when there is enough work to split (harmless on v5e/v6e).
        if pl.cdiv(rows, tile_rows) < 2 and rows >= 2 * _SUBLANE:
            tile_rows = max(_SUBLANE, (pl.cdiv(rows, 2) // _SUBLANE) * _SUBLANE)

    grid = (pl.cdiv(rows, tile_rows),)

    out2d = pl.pallas_call(
        _sigmoid_kernel,
        out_shape=jax.ShapeDtypeStruct((rows, W), dtype),
        grid_spec=pltpu.PrefetchScalarGridSpec(
            num_scalar_prefetch=0,
            grid=grid,
            in_specs=[pl.BlockSpec((tile_rows, W), lambda i: (i, 0))],
            out_specs=pl.BlockSpec((tile_rows, W), lambda i: (i, 0)),
        ),
        compiler_params=pltpu.CompilerParams(
            dimension_semantics=("parallel",),
            # ~8 MiB of double-buffered tiles; raise the scoped VMEM limit so
            # v5e's 16 MiB default never constrains pipelining (32 MiB is the
            # v6e/v7x default and fits every generation's physical VMEM).
            vmem_limit_bytes=32 * 1024 * 1024,
        ),
    )(x2d)

    out_flat = out2d.reshape(-1)
    if padded_n != n:
        out_flat = out_flat[:n]
    return out_flat.reshape(orig_shape)


if __name__ == "__main__":
    key = jax.random.PRNGKey(0)
    k1, k2 = jax.random.split(key)

    # NCHW input, matching PyTorch conventions (sigmoid is layout-agnostic).
    x = jax.random.normal(k1, (2, 4, 16, 16), dtype=jnp.float32)
    out = sigmoid_pallas(x)
    jax.block_until_ready(out)
    ref = jax.nn.sigmoid(x)
    assert out.shape == x.shape and out.dtype == x.dtype
    assert jnp.allclose(out, ref, atol=1e-6, rtol=1e-6)

    # Also exercise the ragged (pad-fallback) path with an awkward size.
    x_odd = jax.random.normal(k2, (3, 5, 7), dtype=jnp.float32)
    out_odd = sigmoid_pallas(x_odd)
    jax.block_until_ready(out_odd)
    assert out_odd.shape == x_odd.shape and out_odd.dtype == x_odd.dtype
    assert jnp.allclose(out_odd, jax.nn.sigmoid(x_odd), atol=1e-6, rtol=1e-6)

    print("KERNEL_OK")
</pallas_src>

<mosaic_0001>
module attributes {stable_mosaic.version = 11 : i64} {
  func.func @_sigmoid_kernel(%arg0: i32, %arg1: memref<8x256xf32, #tpu.memory_space<vmem>>, %arg2: memref<8x256xf32, #tpu.memory_space<vmem>>) attributes {dimension_semantics = [#tpu.dimension_semantics<parallel>], iteration_bounds = array<i64: 1>, scalar_prefetch = 0 : i64, scratch_operands = 0 : i64, tpu.core_type = #tpu.core_type<tc>, window_params = [{transform_indices = @transform_0, window_bounds = array<i64: 8, 256>}, {transform_indices = @transform_1, window_bounds = array<i64: 8, 256>}]} {
    %c0 = arith.constant 0 : index
    %c0_0 = arith.constant 0 : index
    %0 = vector.load %arg1[%c0, %c0_0] : memref<8x256xf32, #tpu.memory_space<vmem>>, vector<8x256xf32>
    %cst = arith.constant 0.000000e+00 : f32
    %1 = vector.broadcast %cst : f32 to vector<8x256xf32>
    %2 = arith.subf %1, %0 : vector<8x256xf32>
    %3 = math.exp %2 : vector<8x256xf32>
    %cst_1 = arith.constant 1.000000e+00 : f32
    %4 = vector.broadcast %cst_1 : f32 to vector<8x256xf32>
    %5 = arith.addf %4, %3 : vector<8x256xf32>
    %cst_2 = arith.constant 1.000000e+00 : f32
    %6 = vector.broadcast %cst_2 : f32 to vector<8x256xf32>
    %7 = arith.divf %6, %5 : vector<8x256xf32>
    %c0_3 = arith.constant 0 : index
    %c0_4 = arith.constant 0 : index
    %8 = vector.load %arg2[%c0_3, %c0_4] : memref<8x256xf32, #tpu.memory_space<vmem>>, vector<8x256xf32>
    tpu.vector_store %arg2[%c0_3, %c0_4], %7 {strides = array<i32>} : memref<8x256xf32, #tpu.memory_space<vmem>>, vector<8x256xf32>,
    return
  }
  func.func @transform_0(%arg0: i32) -> (i32, i32) {
    %c0_i32 = arith.constant 0 : i32
    %c0_i32_0 = arith.constant 0 : i32
    return %arg0, %c0_i32 : i32, i32
  }
  func.func @transform_1(%arg0: i32) -> (i32, i32) {
    %c0_i32 = arith.constant 0 : i32
    %c0_i32_0 = arith.constant 0 : i32
    return %arg0, %c0_i32 : i32, i32
  }
}

</mosaic_0001>

<llo_original>
// kernel: tpu_custom_call.1
$region0: #{tpu_custom_call.1}
  #allocation0 [shape = 'u32[]', space=smem, size = 0x4, offset = 0x4, fixed_abs, tag = 'smem constant byte address 0x4 - core index']
  #allocation1 [shape = 'u32[144,128]{1,0:T(1,128)}', space=vmem, size = 0x12000, scoped, tag = 'internal scratch']
  %s0 = inlined_call_operand.hbm [shape: f32[8,256], index: 0, kind: input, shape index: {}]
  %s1 = inlined_call_operand.hbm [shape: f32[8,256], index: 1, kind: output, shape index: {}]
  %s2 = sld [smem:[#allocation0]]
  $region18: #{tpu_custom_call.1} parent=0
    _
  %s4 = ssub.s32 1, %s2
  %s5 = scalar_select 0, %s4, %s2
  $region1: #{tpu_custom_call.1} parent=0
    #allocation2 [shape = 'u8[8192]{0}', space=vmem, size = 0x2000, scoped, tag = 'input window, operand 0, single buffered']
    #allocation3 [shape = 's32[1]{0}', space=sflag, size = 0x4, scoped, tag = 'scoped memory for tpu_custom_call.1']
    #allocation4 [shape = 's32[1]{0}', space=sflag, size = 0x4, scoped, tag = 'scoped memory for tpu_custom_call.1']
    #allocation5 [shape = 'u8[8192]{0}', space=vmem, size = 0x2000, scoped, tag = 'output window, operand 0, single buffered']
    %6 = vsyncpa [#allocation3], 0
    %7 = vsyncpa [#allocation4], 0
    // Predicated region
    $region2: #{tpu_custom_call.1} parent=1 // pred_check
      _
    $region3: #{tpu_custom_call.1} parent=1 // pred_check_branch
      %9 = sbr.rel (0) target = $region5
    $region4: #{tpu_custom_call.1} parent=1 // pred_region
      %s11 = ssub.s32 256, 256
      %12 = vsyncadd [#allocation3], %s11
      %s14 = sshll.u32 [#allocation2], 4
      %s15 = int_to_ptr.vmem [resolvable:$true] %s14
      %17 = dma.hbm_to_vmem [thread:$0]  %s0, 256, %s15, [#allocation3]
    $region5: #{tpu_custom_call.1} parent=1 // pred_fallthru
      _
    // Predicated region
    $region6: #{tpu_custom_call.1} parent=1 // pred_check
      _
    $region7: #{tpu_custom_call.1} parent=1 // pred_check_branch
      %19 = sbr.rel (0) target = $region9
    $region8: #{tpu_custom_call.1} parent=1 // pred_region
      %20 = dma.done [#allocation3], 256
    $region9: #{tpu_custom_call.1} parent=1 // pred_fallthru
      _
    %v21 = vld [vmem:[#allocation2] sm:$0xff]
    %v22 = vld [vmem:[#allocation2 + $0x8] sm:$0xff]
    %v23 = vsub.f32 0.0, %v21
    %v24 = vsub.f32 0.0, %v22
    %v25 = vmul.f32 %v23, 1.442695
    %v26 = vpow.pop %v25
    %v27 = vmul.f32 %v24, 1.442695
    %v28 = vpow.pop %v27
    %v29 = vadd.f32 %v26, 1.0
    %v30 = vadd.f32 %v28, 1.0
    %v31 = vrcp.pop %v29
    %v32 = vmul.f32 1.0, %v31
    %v33 = vrcp.pop %v30
    %v34 = vmul.f32 1.0, %v33
    %35 = vst [vmem:[#allocation5] sm:$0xff] %v32
    %36 = vst [vmem:[#allocation5 + $0x8] sm:$0xff] %v34
    // Predicated region
    $region10: #{tpu_custom_call.1} parent=1 // pred_check
      _
    $region11: #{tpu_custom_call.1} parent=1 // pred_check_branch
      %38 = sbr.rel (0) target = $region13
    $region12: #{tpu_custom_call.1} parent=1 // pred_region
      %s40 = ssub.s32 256, 256
      %41 = vsyncadd [#allocation4], %s40
      %s43 = sshll.u32 [#allocation5], 4
      %s44 = int_to_ptr.vmem [resolvable:$true] %s43
      %46 = dma.vmem_to_hbm [thread:$0]  %s44, 256, %s1, [#allocation4]
    $region13: #{tpu_custom_call.1} parent=1 // pred_fallthru
      _
    // Predicated region
    $region14: #{tpu_custom_call.1} parent=1 // pred_check
      _
    $region15: #{tpu_custom_call.1} parent=1 // pred_check_branch
      %48 = sbr.rel (0) target = $region17
    $region16: #{tpu_custom_call.1} parent=1 // pred_region
      %49 = dma.done [#allocation4], 256
    $region17: #{tpu_custom_call.1} parent=1 // pred_fallthru
      _
    %50 = vsyncpa [#allocation3], 1
    %51 = vsyncpa [#allocation4], 1

</llo_original>
